<compile_context>
chip_gen: v7x
topology: tpu7x:2x2x1
jax: 0.10.0
libtpu: 0.0.40
codegen_flags: <defaults>
</compile_context>

<pallas_src>
import jax
import jax.numpy as jnp
from jax.experimental import pallas as pl
from jax.experimental.pallas import tpu as pltpu


def _glu_kernel_split(a_ref, b_ref, o_ref):
    # a_ref, b_ref, o_ref: (TR, H) VMEM tiles; H % 128 == 0 here so both input
    # tiles are lane-aligned plain vld's (no in-kernel lane shuffle).
    a = a_ref[...]
    b32 = b_ref[...].astype(jnp.float32)
    # sigmoid = 1 / (1 + exp(-b)): exp and approx reciprocal both land on the
    # EUP slot; kernel is HBM-bandwidth bound so compute stays hidden.
    sig = pl.reciprocal(1.0 + jnp.exp(-b32), approx=True)
    o_ref[...] = (a * sig.astype(a.dtype)).astype(o_ref.dtype)


def _glu_kernel_fused(x_ref, o_ref):
    # Fallback for H not a multiple of 128 (e.g. tiny test shapes): one
    # full-width (TR, 2H) block, split inside the kernel.
    h = o_ref.shape[-1]
    a = x_ref[:, :h]
    b32 = x_ref[:, h:].astype(jnp.float32)
    sig = pl.reciprocal(1.0 + jnp.exp(-b32), approx=True)
    o_ref[...] = (a * sig.astype(a.dtype)).astype(o_ref.dtype)


def glu(x, *, max_block_rows=2048, vmem_budget_bytes=24 << 20):
    """Pallas GLU over the last axis: x (..., 2H) -> (..., H)."""
    *lead, two_h = x.shape
    assert two_h % 2 == 0, "last dim must be even for GLU"
    h = two_h // 2
    rows = 1
    for d in lead:
        rows *= d
    x2 = x.reshape(rows, two_h)
    dtype_bytes = jnp.dtype(x.dtype).itemsize

    # Row tile: biggest block whose double-buffered (input + output) working
    # set stays under the budget -> fits the default scoped VMEM on all gens.
    bytes_per_row = 2 * (two_h + h) * dtype_bytes  # 2x for double-buffering
    tr = max(16, min(max_block_rows, vmem_budget_bytes // max(1, bytes_per_row)))
    tr = (tr // 16) * 16  # multiple of 8 (f32) / 16 (bf16) sublanes

    # Pad rows so the grid tiles exactly; padded rows are sliced off at the end.
    rows_pad = pl.cdiv(rows, 16) * 16
    if rows_pad < tr:
        tr = rows_pad
    rows_pad = pl.cdiv(rows_pad, tr) * tr
    if rows_pad != rows:
        x2 = jnp.pad(x2, ((0, rows_pad - rows), (0, 0)))

    grid = (rows_pad // tr,)
    cparams = pltpu.CompilerParams(
        # Row blocks are independent -> shard across both TCs on v7x.
        dimension_semantics=("parallel",),
        # v5e default scoped VMEM is only 16 MiB; raise explicitly but stay
        # well under v7x's 64 MiB physical VMEM.
        vmem_limit_bytes=48 * 1024 * 1024,
    )
    cost = pl.CostEstimate(
        flops=3 * rows_pad * h,
        transcendentals=rows_pad * h,
        bytes_accessed=3 * rows_pad * h * dtype_bytes,
    )
    out_shape = jax.ShapeDtypeStruct((rows_pad, h), x.dtype)

    if h % 128 == 0:
        # a/b halves fetched as two lane-aligned tiles straight from HBM.
        grid_spec = pltpu.PrefetchScalarGridSpec(
            num_scalar_prefetch=0,
            grid=grid,
            in_specs=[
                pl.BlockSpec((tr, h), lambda i: (i, 0)),  # a half
                pl.BlockSpec((tr, h), lambda i: (i, 1)),  # b half
            ],
            out_specs=pl.BlockSpec((tr, h), lambda i: (i, 0)),
        )
        out2 = pl.pallas_call(
            _glu_kernel_split,
            out_shape=out_shape,
            grid_spec=grid_spec,
            compiler_params=cparams,
            cost_estimate=cost,
        )(x2, x2)
    else:
        # TODO(synk): for tiny H (<128) the output stores are lane-masked; a
        # fully lane-dense repack would need an HBM transpose, so the simple
        # full-width fallback is used for unaligned H.
        grid_spec = pltpu.PrefetchScalarGridSpec(
            num_scalar_prefetch=0,
            grid=grid,
            in_specs=[pl.BlockSpec((tr, two_h), lambda i: (i, 0))],
            out_specs=pl.BlockSpec((tr, h), lambda i: (i, 0)),
        )
        out2 = pl.pallas_call(
            _glu_kernel_fused,
            out_shape=out_shape,
            grid_spec=grid_spec,
            compiler_params=cparams,
            cost_estimate=cost,
        )(x2)

    if rows_pad != rows:
        out2 = out2[:rows]
    return out2.reshape(*lead, h)


def _glu_ref(x):
    a, b = jnp.split(x, 2, axis=-1)
    return a * jax.nn.sigmoid(b)


if __name__ == "__main__":
    key = jax.random.PRNGKey(0)
    # Tolerance covers the approx EUP reciprocal used for the sigmoid
    # (~1e-4 relative error), as recommended by the perf review.
    tol = dict(atol=1e-2, rtol=1e-2)

    # 1) Shape implied by the module: (batch=2, seq=8, hidden=32).
    #    H=16 is not lane-aligned -> exercises the fused fallback path.
    x1 = jax.random.normal(key, (2, 8, 32), dtype=jnp.float32)
    out1 = jax.block_until_ready(glu(x1))
    assert out1.shape == (2, 8, 16)
    assert jnp.allclose(out1, _glu_ref(x1), **tol)

    # 2) Lane-aligned H=128 -> exercises the split (two-BlockSpec) fast path.
    x2 = jax.random.normal(jax.random.PRNGKey(1), (2, 8, 256), dtype=jnp.float32)
    out2 = jax.block_until_ready(glu(x2))
    assert out2.shape == (2, 8, 128)
    assert jnp.allclose(out2, _glu_ref(x2), **tol)

    # 3) Row count not a multiple of the tile -> exercises padding/slicing.
    x3 = jax.random.normal(jax.random.PRNGKey(2), (3, 5, 32), dtype=jnp.float32)
    out3 = jax.block_until_ready(glu(x3))
    assert out3.shape == (3, 5, 16)
    assert jnp.allclose(out3, _glu_ref(x3), **tol)

    print("KERNEL_OK")
</pallas_src>

<mosaic_0001>
module attributes {stable_mosaic.version = 11 : i64} {
  func.func @_glu_kernel_fused(%arg0: i32, %arg1: memref<16x32xf32, #tpu.memory_space<vmem>>, %arg2: memref<16x16xf32, #tpu.memory_space<vmem>>) attributes {dimension_semantics = [#tpu.dimension_semantics<parallel>], iteration_bounds = array<i64: 1>, scalar_prefetch = 0 : i64, scratch_operands = 0 : i64, tpu.core_type = #tpu.core_type<tc>, window_params = [{transform_indices = @transform_0, window_bounds = array<i64: 16, 32>}, {transform_indices = @transform_1, window_bounds = array<i64: 16, 16>}]} {
    %c0 = arith.constant 0 : index
    %c0_0 = arith.constant 0 : index
    %0 = vector.load %arg1[%c0, %c0_0] : memref<16x32xf32, #tpu.memory_space<vmem>>, vector<16x16xf32>
    %c0_1 = arith.constant 0 : index
    %c16 = arith.constant 16 : index
    %1 = vector.load %arg1[%c0_1, %c16] : memref<16x32xf32, #tpu.memory_space<vmem>>, vector<16x16xf32>
    %cst = arith.constant 0.000000e+00 : f32
    %2 = vector.broadcast %cst : f32 to vector<16x16xf32>
    %3 = arith.subf %2, %1 : vector<16x16xf32>
    %4 = math.exp %3 : vector<16x16xf32>
    %cst_2 = arith.constant 1.000000e+00 : f32
    %5 = vector.broadcast %cst_2 : f32 to vector<16x16xf32>
    %6 = arith.addf %5, %4 : vector<16x16xf32>
    %7 = tpu.reciprocal %6 {approx = true} : vector<16x16xf32> -> vector<16x16xf32>
    %8 = arith.mulf %0, %7 : vector<16x16xf32>
    %c0_3 = arith.constant 0 : index
    %c0_4 = arith.constant 0 : index
    %9 = vector.load %arg2[%c0_3, %c0_4] : memref<16x16xf32, #tpu.memory_space<vmem>>, vector<16x16xf32>
    tpu.vector_store %arg2[%c0_3, %c0_4], %8 {strides = array<i32>} : memref<16x16xf32, #tpu.memory_space<vmem>>, vector<16x16xf32>,
    return
  }
  func.func @transform_0(%arg0: i32) -> (i32, i32) {
    %c0_i32 = arith.constant 0 : i32
    %c0_i32_0 = arith.constant 0 : i32
    return %arg0, %c0_i32 : i32, i32
  }
  func.func @transform_1(%arg0: i32) -> (i32, i32) {
    %c0_i32 = arith.constant 0 : i32
    %c0_i32_0 = arith.constant 0 : i32
    return %arg0, %c0_i32 : i32, i32
  }
}

</mosaic_0001>

<llo_original>
// kernel: tpu_custom_call.1
$region0: #{tpu_custom_call.1}
  #allocation0 [shape = 'u32[]', space=smem, size = 0x4, offset = 0x4, fixed_abs, tag = 'smem constant byte address 0x4 - core index']
  #allocation1 [shape = 'u32[144,128]{1,0:T(1,128)}', space=vmem, size = 0x12000, scoped, tag = 'internal scratch']
  %s0 = inlined_call_operand.hbm [shape: f32[16,32], index: 0, kind: input, shape index: {}]
  %s1 = inlined_call_operand.hbm [shape: f32[16,16], index: 1, kind: output, shape index: {}]
  %s2 = sld [smem:[#allocation0]]
  $region18: #{tpu_custom_call.1} parent=0
    _
  %s4 = ssub.s32 1, %s2
  %s5 = scalar_select 0, %s4, %s2
  $region1: #{tpu_custom_call.1} parent=0
    #allocation2 [shape = 'u8[8192]{0}', space=vmem, size = 0x2000, scoped, tag = 'input window, operand 0, single buffered']
    #allocation3 [shape = 's32[1]{0}', space=sflag, size = 0x4, scoped, tag = 'scoped memory for tpu_custom_call.1']
    #allocation4 [shape = 's32[1]{0}', space=sflag, size = 0x4, scoped, tag = 'scoped memory for tpu_custom_call.1']
    #allocation5 [shape = 'u8[8192]{0}', space=vmem, size = 0x2000, scoped, tag = 'output window, operand 0, single buffered']
    %6 = vsyncpa [#allocation3], 0
    %7 = vsyncpa [#allocation4], 0
    // Predicated region
    $region2: #{tpu_custom_call.1} parent=1 // pred_check
      _
    $region3: #{tpu_custom_call.1} parent=1 // pred_check_branch
      %9 = sbr.rel (0) target = $region5
    $region4: #{tpu_custom_call.1} parent=1 // pred_region
      %s11 = ssub.s32 256, 256
      %12 = vsyncadd [#allocation3], %s11
      %s13 = sshll.u32 [#allocation2], 4
      %s14 = int_to_ptr.vmem [resolvable:$true] %s13
      %19 = dma.hbm_to_vmem [thread:$0]  %s0, 256, %s14, [#allocation3], 128, 128, 8
    $region5: #{tpu_custom_call.1} parent=1 // pred_fallthru
      _
    // Predicated region
    $region6: #{tpu_custom_call.1} parent=1 // pred_check
      _
    $region7: #{tpu_custom_call.1} parent=1 // pred_check_branch
      %21 = sbr.rel (0) target = $region9
    $region8: #{tpu_custom_call.1} parent=1 // pred_region
      %22 = dma.done [#allocation3], 256
    $region9: #{tpu_custom_call.1} parent=1 // pred_fallthru
      _
    %v23 = vld [vmem:[#allocation2] sm:$0xff]
    %v24 = vld [vmem:[#allocation2 + $0x8] sm:$0xff]
    %v25 = vsub.f32 0.0, %v23
    %v26 = vsub.f32 0.0, %v24
    %v27 = vmul.f32 %v25, 1.442695
    %v28 = vpow.pop %v27
    %v29 = vmul.f32 %v26, 1.442695
    %v30 = vpow.pop %v29
    %v31 = vadd.f32 %v28, 1.0
    %v32 = vadd.f32 %v30, 1.0
    %v33 = vrcp.pop %v31
    %v34 = vrcp.pop %v32
    %37 = vrot.lane.b32.xlu0 %v33, 112
    %v38 = vpop.permute.xlu0 %37
    %39 = vrot.lane.b32.xlu0 %v34, 112
    %v40 = vpop.permute.xlu0 %39
    %v43 = vmul.f32 %v23, %v38
    %v44 = vmul.f32 %v24, %v40
    %vm45 = vcmask 130048
    %46 = vst.msk [vmem:[#allocation5] sm:$0xff] %vm45, %v43
    %47 = vst.msk [vmem:[#allocation5 + $0x8] sm:$0xff] %vm45, %v44
    // Predicated region
    $region10: #{tpu_custom_call.1} parent=1 // pred_check
      _
    $region11: #{tpu_custom_call.1} parent=1 // pred_check_branch
      %49 = sbr.rel (0) target = $region13
    $region12: #{tpu_custom_call.1} parent=1 // pred_region
      %s51 = ssub.s32 256, 256
      %52 = vsyncadd [#allocation4], %s51
      %s53 = sshll.u32 [#allocation5], 4
      %s54 = int_to_ptr.vmem [resolvable:$true] %s53
      %59 = dma.vmem_to_hbm [thread:$0]  %s54, 256, %s1, [#allocation4], 128, 128, 8
    $region13: #{tpu_custom_call.1} parent=1 // pred_fallthru
      _
    // Predicated region
    $region14: #{tpu_custom_call.1} parent=1 // pred_check
      _
    $region15: #{tpu_custom_call.1} parent=1 // pred_check_branch
      %61 = sbr.rel (0) target = $region17
    $region16: #{tpu_custom_call.1} parent=1 // pred_region
      %62 = dma.done [#allocation4], 256
    $region17: #{tpu_custom_call.1} parent=1 // pred_fallthru
      _
    %63 = vsyncpa [#allocation3], 1
    %64 = vsyncpa [#allocation4], 1

</llo_original>
